<compile_context>
chip_gen: v6e
topology: v6e:2x2x1
jax: 0.10.0
libtpu: 0.0.40
codegen_flags: <defaults>
</compile_context>

<pallas_src>
import functools

import jax
import jax.numpy as jnp
from jax.experimental import pallas as pl
from jax.experimental.pallas import tpu as pltpu

_EPS = 1e-8                      # torch.nn.functional.cosine_similarity default
_EPS_SQ = _EPS * _EPS            # Python float -> folded as a literal (no captured consts)

_SAFE_TILE_BUDGET = 28 * 1024 * 1024   # fits v7x (64 MiB physical / 32 MiB scoped default)
_BIG_TILE_BUDGET = 64 * 1024 * 1024    # v5e / v6e (128 MiB physical VMEM)


def _round_up(x, m):
    return ((x + m - 1) // m) * m


def _round_down(x, m):
    return max(m, (x // m) * m)


def _tile_budget_bytes():
    try:
        if pltpu.get_tpu_info().vmem_capacity_bytes >= 100 * 1024 * 1024:
            return _BIG_TILE_BUDGET
    except Exception:            # interpret mode / unknown chip -> conservative budget
        pass
    return _SAFE_TILE_BUDGET


def _cosdist_kernel(x1_ref, x2_ref, o_ref, n1_acc, n2_acc, *, valid_d, dk):
    """Row-layout cosine distance with a reduction grid axis over features."""
    k = pl.program_id(1)

    @pl.when(k == 0)
    def _init():
        o_ref[...] = jnp.zeros_like(o_ref)       # dot-product accumulator (resident)
        n1_acc[...] = jnp.zeros_like(n1_acc)
        n2_acc[...] = jnp.zeros_like(n2_acc)

    x1 = x1_ref[...].astype(jnp.float32)          # (bm, dk)
    x2 = x2_ref[...].astype(jnp.float32)

    if valid_d % dk != 0:                         # static check: ragged feature tail
        col = jax.lax.broadcasted_iota(jnp.int32, x1.shape, 1)
        mask = (k * dk + col) < valid_d
        x1 = jnp.where(mask, x1, 0.0)
        x2 = jnp.where(mask, x2, 0.0)

    o_ref[...] += jnp.sum(x1 * x2, axis=1, keepdims=True)
    n1_acc[...] += jnp.sum(x1 * x1, axis=1, keepdims=True)
    n2_acc[...] += jnp.sum(x2 * x2, axis=1, keepdims=True)

    @pl.when(k == pl.num_programs(1) - 1)
    def _finalize():
        # 1/max(||x||, eps) == rsqrt(max(||x||^2, eps^2)); rsqrt runs on the EUP.
        inv = jax.lax.rsqrt(jnp.maximum(n1_acc[...], _EPS_SQ)) * jax.lax.rsqrt(
            jnp.maximum(n2_acc[...], _EPS_SQ))
        o_ref[...] = 1.0 - o_ref[...] * inv


@functools.partial(jax.jit, static_argnames=("block_b", "block_d"))
def cosine_distance(x1, x2, *, block_b=None, block_d=None):
    """1 - cosine_similarity(x1, x2, dim=1). x1, x2: (B, D) -> (B,) float32."""
    assert x1.shape == x2.shape and x1.ndim == 2
    B, D = x1.shape
    itemsize = jnp.dtype(x1.dtype).itemsize
    sub = max(8, 32 // itemsize)                 # min sublane multiple for dtype packing

    # Bytes per (bm, dk) grid step: 2 inputs x 2 pipeline buffers in the input
    # dtype plus ~2 f32 upcast temporaries of the same tile size.
    budget = _tile_budget_bytes()
    elem_budget = max(budget // (4 * itemsize + 2 * 4), sub * 128)

    if block_d is not None:
        dk = min(block_d, D)
    elif D * sub <= elem_budget:
        dk = D                                   # whole feature dim in a single block
    else:
        dk = min(_round_up(D, 128), _round_down(elem_budget // sub, 128), 2048)

    if block_b is not None:
        bm = min(block_b, B)
    else:
        bm_fit = max(sub, elem_budget // dk)
        bm = B if B <= bm_fit else _round_down(min(bm_fit, 4096), sub)

    grid = (pl.cdiv(B, bm), pl.cdiv(D, dk))
    in_spec = pl.BlockSpec((bm, dk), lambda i, k: (i, k))
    out_spec = pl.BlockSpec((bm, 1), lambda i, k: (i, 0))

    tile = bm * dk
    vmem_needed = (4 * tile * itemsize           # 2 inputs x 2 pipeline buffers
                   + 2 * tile * 4                # f32 upcast temporaries
                   + 8 * bm * 4                  # output block + norm scratch
                   + (2 << 20))                  # headroom
    vmem_limit = int(min(100 * 1024 * 1024, max(32 * 1024 * 1024, vmem_needed)))

    kernel = functools.partial(_cosdist_kernel, valid_d=D, dk=dk)
    out = pl.pallas_call(
        kernel,
        out_shape=jax.ShapeDtypeStruct((B, 1), jnp.float32),
        grid_spec=pltpu.PrefetchScalarGridSpec(
            num_scalar_prefetch=0,
            grid=grid,
            in_specs=[in_spec, in_spec],
            out_specs=out_spec,
            scratch_shapes=[pltpu.VMEM((bm, 1), jnp.float32)] * 2,
        ),
        compiler_params=pltpu.CompilerParams(
            dimension_semantics=("parallel", "arbitrary"),
            vmem_limit_bytes=vmem_limit,
        ),
        cost_estimate=pl.CostEstimate(
            flops=6 * B * D,                     # 3 mults + 3 adds per element
            transcendentals=2 * B,               # two rsqrts per row
            bytes_accessed=2 * B * D * itemsize + B * 4,
        ),
    )(x1, x2)
    return out[:, 0]


def _reference(x1, x2, eps=_EPS):
    x1 = x1.astype(jnp.float32)
    x2 = x2.astype(jnp.float32)
    dot = jnp.sum(x1 * x2, axis=1)
    n1 = jnp.maximum(jnp.linalg.norm(x1, axis=1), eps)
    n2 = jnp.maximum(jnp.linalg.norm(x2, axis=1), eps)
    return 1.0 - dot / (n1 * n2)


if __name__ == "__main__":
    key = jax.random.PRNGKey(0)
    k1, k2, k3, k4 = jax.random.split(key, 4)

    # Test 1: small shapes consistent with the module (batch=8, hidden=32).
    B, D = 8, 32
    x1 = jax.random.normal(k1, (B, D), dtype=jnp.float32)
    x2 = jax.random.normal(k2, (B, D), dtype=jnp.float32)
    out = jax.block_until_ready(cosine_distance(x1, x2))
    ref = _reference(x1, x2)
    assert out.shape == (B,)
    assert jnp.allclose(out, ref, atol=2e-5, rtol=2e-5), (out, ref)

    # Test 2: larger, non-tile-divisible shape on the default single-block path.
    B2, D2 = 300, 640
    y1 = jax.random.normal(k3, (B2, D2), dtype=jnp.float32)
    y2 = jax.random.normal(k4, (B2, D2), dtype=jnp.float32)
    out2 = jax.block_until_ready(cosine_distance(y1, y2))
    ref2 = _reference(y1, y2)
    assert out2.shape == (B2,)
    assert jnp.allclose(out2, ref2, atol=2e-5, rtol=2e-5)

    # Test 3: force batch + feature tiling with ragged tails to exercise the
    # reduction-axis accumulation and the in-kernel tail masking.
    out3 = jax.block_until_ready(cosine_distance(y1, y2, block_b=128, block_d=256))
    assert out3.shape == (B2,)
    assert jnp.allclose(out3, ref2, atol=2e-5, rtol=2e-5)

    print("KERNEL_OK")
</pallas_src>

<mosaic_0001>
module attributes {stable_mosaic.version = 11 : i64} {
  func.func @_cosdist_kernel(%arg0: i32, %arg1: i32, %arg2: memref<8x32xf32, #tpu.memory_space<vmem>>, %arg3: memref<8x32xf32, #tpu.memory_space<vmem>>, %arg4: memref<8x1xf32, #tpu.memory_space<vmem>>, %arg5: memref<8x1xf32, #tpu.memory_space<vmem>>, %arg6: memref<8x1xf32, #tpu.memory_space<vmem>>) attributes {dimension_semantics = [#tpu.dimension_semantics<parallel>, #tpu.dimension_semantics<arbitrary>], iteration_bounds = array<i64: 1, 1>, scalar_prefetch = 0 : i64, scratch_operands = 2 : i64, tpu.core_type = #tpu.core_type<tc>, window_params = [{transform_indices = @transform_0, window_bounds = array<i64: 8, 32>}, {transform_indices = @transform_1, window_bounds = array<i64: 8, 32>}, {transform_indices = @transform_2, window_bounds = array<i64: 8, 1>}]} {
    %c0_i32 = arith.constant 0 : i32
    %0 = arith.cmpi eq, %arg1, %c0_i32 : i32
    %1 = arith.extui %0 : i1 to i32
    %c0_i32_0 = arith.constant 0 : i32
    %2 = arith.cmpi ne, %1, %c0_i32_0 : i32
    scf.if %2 {
      %cst_20 = arith.constant 0.000000e+00 : f32
      %26 = vector.broadcast %cst_20 : f32 to vector<8x1xf32>
      %c0_21 = arith.constant 0 : index
      %c0_22 = arith.constant 0 : index
      %27 = vector.load %arg4[%c0_21, %c0_22] : memref<8x1xf32, #tpu.memory_space<vmem>>, vector<8x1xf32>
      tpu.vector_store %arg4[%c0_21, %c0_22], %26 {strides = array<i32>} : memref<8x1xf32, #tpu.memory_space<vmem>>, vector<8x1xf32>,
      %cst_23 = arith.constant 0.000000e+00 : f32
      %28 = vector.broadcast %cst_23 : f32 to vector<8x1xf32>
      %c0_24 = arith.constant 0 : index
      %c0_25 = arith.constant 0 : index
      %29 = vector.load %arg5[%c0_24, %c0_25] : memref<8x1xf32, #tpu.memory_space<vmem>>, vector<8x1xf32>
      tpu.vector_store %arg5[%c0_24, %c0_25], %28 {strides = array<i32>} : memref<8x1xf32, #tpu.memory_space<vmem>>, vector<8x1xf32>,
      %cst_26 = arith.constant 0.000000e+00 : f32
      %30 = vector.broadcast %cst_26 : f32 to vector<8x1xf32>
      %c0_27 = arith.constant 0 : index
      %c0_28 = arith.constant 0 : index
      %31 = vector.load %arg6[%c0_27, %c0_28] : memref<8x1xf32, #tpu.memory_space<vmem>>, vector<8x1xf32>
      tpu.vector_store %arg6[%c0_27, %c0_28], %30 {strides = array<i32>} : memref<8x1xf32, #tpu.memory_space<vmem>>, vector<8x1xf32>,
    } else {
    }
    %c0 = arith.constant 0 : index
    %c0_1 = arith.constant 0 : index
    %3 = vector.load %arg2[%c0, %c0_1] : memref<8x32xf32, #tpu.memory_space<vmem>>, vector<8x32xf32>
    %c0_2 = arith.constant 0 : index
    %c0_3 = arith.constant 0 : index
    %4 = vector.load %arg3[%c0_2, %c0_3] : memref<8x32xf32, #tpu.memory_space<vmem>>, vector<8x32xf32>
    %c0_4 = arith.constant 0 : index
    %c0_5 = arith.constant 0 : index
    %5 = vector.load %arg4[%c0_4, %c0_5] : memref<8x1xf32, #tpu.memory_space<vmem>>, vector<8x1xf32>
    %6 = arith.mulf %3, %4 : vector<8x32xf32>
    %cst = arith.constant dense<0.000000e+00> : vector<8xf32>
    %7 = vector.multi_reduction <add>, %6, %cst [1] : vector<8x32xf32> to vector<8xf32>
    %8 = vector.shape_cast %7 : vector<8xf32> to vector<8x1xf32>
    %9 = arith.addf %5, %8 : vector<8x1xf32>
    %c0_6 = arith.constant 0 : index
    %c0_7 = arith.constant 0 : index
    %10 = vector.load %arg4[%c0_6, %c0_7] : memref<8x1xf32, #tpu.memory_space<vmem>>, vector<8x1xf32>
    tpu.vector_store %arg4[%c0_6, %c0_7], %9 {strides = array<i32>} : memref<8x1xf32, #tpu.memory_space<vmem>>, vector<8x1xf32>,
    %c0_8 = arith.constant 0 : index
    %c0_9 = arith.constant 0 : index
    %11 = vector.load %arg5[%c0_8, %c0_9] : memref<8x1xf32, #tpu.memory_space<vmem>>, vector<8x1xf32>
    %12 = arith.mulf %3, %3 : vector<8x32xf32>
    %cst_10 = arith.constant dense<0.000000e+00> : vector<8xf32>
    %13 = vector.multi_reduction <add>, %12, %cst_10 [1] : vector<8x32xf32> to vector<8xf32>
    %14 = vector.shape_cast %13 : vector<8xf32> to vector<8x1xf32>
    %15 = arith.addf %11, %14 : vector<8x1xf32>
    %c0_11 = arith.constant 0 : index
    %c0_12 = arith.constant 0 : index
    %16 = vector.load %arg5[%c0_11, %c0_12] : memref<8x1xf32, #tpu.memory_space<vmem>>, vector<8x1xf32>
    tpu.vector_store %arg5[%c0_11, %c0_12], %15 {strides = array<i32>} : memref<8x1xf32, #tpu.memory_space<vmem>>, vector<8x1xf32>,
    %c0_13 = arith.constant 0 : index
    %c0_14 = arith.constant 0 : index
    %17 = vector.load %arg6[%c0_13, %c0_14] : memref<8x1xf32, #tpu.memory_space<vmem>>, vector<8x1xf32>
    %18 = arith.mulf %4, %4 : vector<8x32xf32>
    %cst_15 = arith.constant dense<0.000000e+00> : vector<8xf32>
    %19 = vector.multi_reduction <add>, %18, %cst_15 [1] : vector<8x32xf32> to vector<8xf32>
    %20 = vector.shape_cast %19 : vector<8xf32> to vector<8x1xf32>
    %21 = arith.addf %17, %20 : vector<8x1xf32>
    %c0_16 = arith.constant 0 : index
    %c0_17 = arith.constant 0 : index
    %22 = vector.load %arg6[%c0_16, %c0_17] : memref<8x1xf32, #tpu.memory_space<vmem>>, vector<8x1xf32>
    tpu.vector_store %arg6[%c0_16, %c0_17], %21 {strides = array<i32>} : memref<8x1xf32, #tpu.memory_space<vmem>>, vector<8x1xf32>,
    %c0_i32_18 = arith.constant 0 : i32
    %23 = arith.cmpi eq, %arg1, %c0_i32_18 : i32
    %24 = arith.extui %23 : i1 to i32
    %c0_i32_19 = arith.constant 0 : i32
    %25 = arith.cmpi ne, %24, %c0_i32_19 : i32
    scf.if %25 {
      %c0_20 = arith.constant 0 : index
      %c0_21 = arith.constant 0 : index
      %26 = vector.load %arg5[%c0_20, %c0_21] : memref<8x1xf32, #tpu.memory_space<vmem>>, vector<8x1xf32>
      %cst_22 = arith.constant 1.000000e-16 : f32
      %27 = vector.broadcast %cst_22 : f32 to vector<8x1xf32>
      %28 = arith.maximumf %26, %27 : vector<8x1xf32>
      %29 = math.rsqrt %28 : vector<8x1xf32>
      %c0_23 = arith.constant 0 : index
      %c0_24 = arith.constant 0 : index
      %30 = vector.load %arg6[%c0_23, %c0_24] : memref<8x1xf32, #tpu.memory_space<vmem>>, vector<8x1xf32>
      %cst_25 = arith.constant 1.000000e-16 : f32
      %31 = vector.broadcast %cst_25 : f32 to vector<8x1xf32>
      %32 = arith.maximumf %30, %31 : vector<8x1xf32>
      %33 = math.rsqrt %32 : vector<8x1xf32>
      %34 = arith.mulf %29, %33 : vector<8x1xf32>
      %c0_26 = arith.constant 0 : index
      %c0_27 = arith.constant 0 : index
      %35 = vector.load %arg4[%c0_26, %c0_27] : memref<8x1xf32, #tpu.memory_space<vmem>>, vector<8x1xf32>
      %36 = arith.mulf %35, %34 : vector<8x1xf32>
      %cst_28 = arith.constant 1.000000e+00 : f32
      %37 = vector.broadcast %cst_28 : f32 to vector<8x1xf32>
      %38 = arith.subf %37, %36 : vector<8x1xf32>
      %c0_29 = arith.constant 0 : index
      %c0_30 = arith.constant 0 : index
      %39 = vector.load %arg4[%c0_29, %c0_30] : memref<8x1xf32, #tpu.memory_space<vmem>>, vector<8x1xf32>
      tpu.vector_store %arg4[%c0_29, %c0_30], %38 {strides = array<i32>} : memref<8x1xf32, #tpu.memory_space<vmem>>, vector<8x1xf32>,
    } else {
    }
    return
  }
  func.func @transform_0(%arg0: i32, %arg1: i32) -> (i32, i32) {
    %c0_i32 = arith.constant 0 : i32
    return %arg0, %arg1 : i32, i32
  }
  func.func @transform_1(%arg0: i32, %arg1: i32) -> (i32, i32) {
    %c0_i32 = arith.constant 0 : i32
    return %arg0, %arg1 : i32, i32
  }
  func.func @transform_2(%arg0: i32, %arg1: i32) -> (i32, i32) {
    %c0_i32 = arith.constant 0 : i32
    %c0_i32_0 = arith.constant 0 : i32
    return %arg0, %c0_i32 : i32, i32
  }
}

</mosaic_0001>

<llo_original>
// kernel: cosine_distance.1
$region0: #{cosine_distance.1}
  #allocation0 [shape = 'u32[]', space=smem, size = 0x4, offset = 0x4, fixed_abs, tag = 'smem constant byte address 0x4 - core index']
  #allocation1 [shape = 'u32[144,128]{1,0:T(1,128)}', space=vmem, size = 0x12000, scoped, tag = 'internal scratch']
  #allocation2 [shape = 'f32[8,1]{1,0:T(8,128)}', space=vmem, size = 0x1000, scoped, tag = 'scratch operand']
  #allocation3 [shape = 'f32[8,1]{1,0:T(8,128)}', space=vmem, size = 0x1000, scoped, tag = 'scratch operand']
  %s0 = inlined_call_operand.hbm [shape: f32[8,32], index: 0, kind: input, shape index: {}]
  %s1 = inlined_call_operand.hbm [shape: f32[8,32], index: 1, kind: input, shape index: {}]
  %s2 = inlined_call_operand.vmem [shape: f32[8,1], index: 2, kind: output, shape index: {}]
  %s3 = sld [smem:[#allocation0]]
  $region34: #{cosine_distance.1} parent=0
    _
  %s5 = ssub.s32 1, %s3
  %s6 = scalar_select 0, %s5, %s3
  $region1: #{cosine_distance.1} parent=0
    #allocation4 [shape = 'u8[4096]{0}', space=vmem, size = 0x1000, scoped, tag = 'input window, operand 0, single buffered']
    #allocation5 [shape = 's32[1]{0}', space=sflag, size = 0x4, scoped, tag = 'scoped memory for cosine_distance.1']
    #allocation6 [shape = 'u8[4096]{0}', space=vmem, size = 0x1000, scoped, tag = 'input window, operand 1, single buffered']
    #allocation7 [shape = 's32[1]{0}', space=sflag, size = 0x4, scoped, tag = 'scoped memory for cosine_distance.1']
    %7 = vsyncpa [#allocation5], 0
    %8 = vsyncpa [#allocation7], 0
    // Predicated region
    $region2: #{cosine_distance.1} parent=1 // pred_check
      _
    $region3: #{cosine_distance.1} parent=1 // pred_check_branch
      %10 = sbr.rel (0) target = $region5
    $region4: #{cosine_distance.1} parent=1 // pred_region
      %s12 = ssub.s32 128, 128
      %13 = vsyncadd [#allocation5], %s12
      %s15 = sshll.u32 [#allocation4], 4
      %s16 = int_to_ptr.vmem [resolvable:$true] %s15
      %18 = dma.hbm_to_vmem [thread:$0]  %s0, 128, %s16, [#allocation5]
    $region5: #{cosine_distance.1} parent=1 // pred_fallthru
      _
    // Predicated region
    $region6: #{cosine_distance.1} parent=1 // pred_check
      _
    $region7: #{cosine_distance.1} parent=1 // pred_check_branch
      %20 = sbr.rel (0) target = $region9
    $region8: #{cosine_distance.1} parent=1 // pred_region
      %s22 = ssub.s32 128, 128
      %23 = vsyncadd [#allocation7], %s22
      %s25 = sshll.u32 [#allocation6], 4
      %s26 = int_to_ptr.vmem [resolvable:$true] %s25
      %28 = dma.hbm_to_vmem [thread:$0]  %s1, 128, %s26, [#allocation7]
    $region9: #{cosine_distance.1} parent=1 // pred_fallthru
      _
    // Predicated region
    $region10: #{cosine_distance.1} parent=1 // pred_check
      _
    $region11: #{cosine_distance.1} parent=1 // pred_check_branch
      %30 = sbr.rel (0) target = $region13
    $region12: #{cosine_distance.1} parent=1 // pred_region
      %31 = dma.done [#allocation5], 128
    $region13: #{cosine_distance.1} parent=1 // pred_fallthru
      _
    // Predicated region
    $region14: #{cosine_distance.1} parent=1 // pred_check
      _
    $region15: #{cosine_distance.1} parent=1 // pred_check_branch
      %33 = sbr.rel (0) target = $region17
    $region16: #{cosine_distance.1} parent=1 // pred_region
      %34 = dma.done [#allocation7], 128
    $region17: #{cosine_distance.1} parent=1 // pred_fallthru
      _
    %p35 = scmp.eq.s32.totalorder 0, 0
    // Predicated region
    $region18: #{cosine_distance.1} parent=1 // pred_check
      %p36 = pneg %p35
    $region19: #{cosine_distance.1} parent=1 // pred_check_branch
      %38 = sbr.rel (%p36) target = $region21
    $region20: #{cosine_distance.1} parent=1 // pred_region
      %vm39 = vcmask 7168
      %40 = vst.msk [vmem:[%s2] sm:$0xff] %vm39, 0.0
      %41 = vst.msk [vmem:[#allocation2] sm:$0xff] %vm39, 0.0
      %42 = vst.msk [vmem:[#allocation3] sm:$0xff] %vm39, 0.0
    $region21: #{cosine_distance.1} parent=1 // pred_fallthru
      _
    %v43 = vld [vmem:[#allocation4] sm:$0xff]
    %v44 = vld [vmem:[#allocation6] sm:$0xff]
    %v45 = vld [vmem:[%s2] sm:$0xff]
    %v46 = vmul.f32 %v43, %v44
    %vm47 = vcmask 261120
    %v48 = vsel %vm47, %v46, 0.0
    %49 = vadd.xlane.f32.xlu0 %v48
    %v50 = vpop.xlane.xlu0 %49
    %v51 = vadd.f32 %v45, %v50
    %vm52 = vcmask 7168
    %53 = vst.msk [vmem:[%s2] sm:$0xff] %vm52, %v51
    %v54 = vld [vmem:[#allocation2] sm:$0xff]
    %v55 = vmul.f32 %v43, %v43
    %v56 = vsel %vm47, %v55, 0.0
    %57 = vadd.xlane.f32.xlu0 %v56
    %v58 = vpop.xlane.xlu0 %57
    %v59 = vadd.f32 %v54, %v58
    %60 = vst.msk [vmem:[#allocation2] sm:$0xff] %vm52, %v59
    %v61 = vld [vmem:[#allocation3] sm:$0xff]
    %v62 = vmul.f32 %v44, %v44
    %v63 = vsel %vm47, %v62, 0.0
    %64 = vadd.xlane.f32.xlu0 %v63
    %v65 = vpop.xlane.xlu0 %64
    %v66 = vadd.f32 %v61, %v65
    %67 = vst.msk [vmem:[#allocation3] sm:$0xff] %vm52, %v66
    // Predicated region
    $region22: #{cosine_distance.1} parent=1 // pred_check
      %p68 = pneg %p35
    $region23: #{cosine_distance.1} parent=1 // pred_check_branch
      %70 = sbr.rel (%p68) target = $region25
    $region24: #{cosine_distance.1} parent=1 // pred_region
      %v71 = vld [vmem:[#allocation2] sm:$0xff]
      %v72 = vmax.f32 %v71, 1e-16
      %v73 = vrsqrt.pop %v72
      %v74 = vld [vmem:[#allocation3] sm:$0xff]
      %v75 = vmax.f32 %v74, 1e-16
      %v76 = vrsqrt.pop %v75
      %v77 = vmul.f32 %v73, %v76
      %v78 = vld [vmem:[%s2] sm:$0xff]
      %v79 = vmul.f32 %v78, %v77
      %v80 = vsub.f32 1.0, %v79
      %81 = vst.msk [vmem:[%s2] sm:$0xff] %vm52, %v80
    $region25: #{cosine_distance.1} parent=1 // pred_fallthru
      _
    // Predicated region
    $region26: #{cosine_distance.1} parent=1 // pred_check
      _
    $region27: #{cosine_distance.1} parent=1 // pred_check_branch
      %83 = sbr.rel (0) target = $region29
    $region28: #{cosine_distance.1} parent=1 // pred_region
      _
    $region29: #{cosine_distance.1} parent=1 // pred_fallthru
      _
    // Predicated region
    $region30: #{cosine_distance.1} parent=1 // pred_check
      _
    $region31: #{cosine_distance.1} parent=1 // pred_check_branch
      %85 = sbr.rel (0) target = $region33
    $region32: #{cosine_distance.1} parent=1 // pred_region
      _
    $region33: #{cosine_distance.1} parent=1 // pred_fallthru
      _
    %86 = vsyncpa [#allocation5], 1
    %87 = vsyncpa [#allocation7], 1

</llo_original>
